<compile_context>
chip_gen: v5e
topology: v5e:2x2
jax: 0.10.0
libtpu: 0.0.40
codegen_flags: <defaults>
</compile_context>

<pallas_src>
import math

import jax
import jax.numpy as jnp
from jax import lax
from jax.experimental import pallas as pl
from jax.experimental.pallas import tpu as pltpu


def _round_up(x, m):
    return ((x + m - 1) // m) * m


def _choose_batch_tiling(B):
    # bf16 sublane tile is 16 rows -> keep the batch tile a multiple of 16 so the
    # dynamic row offsets (t*bb) into the (T*bb, Hp) scratches stay tile-aligned.
    b_tile = min(128, _round_up(B, 16))
    B_pad = _round_up(B, b_tile)
    nb = B_pad // b_tile
    if nb == 1 and b_tile > 16:
        # prefer >=2 batch blocks so v7x's second TensorCore gets work
        # (one extra ~0.35us grid step on single-TC v5e/v6e: negligible).
        b_tile = max(16, _round_up(b_tile // 2, 16))
        B_pad = _round_up(B, b_tile)
        nb = B_pad // b_tile
    return b_tile, B_pad, nb


def _make_tower_rnn_kernel(L, T, XW, Hp, bb):
    """Fused multi-layer tanh-RNN kernel.

    Kernel refs:
      x_ref    : (T*bb, XW)      bf16 embedded inputs, rows ordered time-major per block
      lens_ref : (bb, 1)         int32 valid lengths (0 for padded batch rows)
      win_ref  : (L, Din, Hp)    bf16 W_ih^T per layer (zero-padded; l>0 uses first Hp rows)
      whh_ref  : (L, Hp, Hp)     bf16 W_hh^T per layer (zero-padded)
      b_ref    : (L, 1, Hp)      f32 (b_ih + b_hh), zero-padded
      enc_ref  : (L, bb, Hp)     f32 final hidden per layer (output)
      pre_scr  : (T*bb, Hp)      f32 scratch: bulk input projection + bias
      seq_scr  : (T*bb, Hp)      bf16 scratch: hidden sequence feeding the next layer
                                  (only allocated when L > 1)
    """

    def kernel(x_ref, lens_ref, win_ref, whh_ref, b_ref, enc_ref, pre_scr, *maybe_seq):
        seq_scr = maybe_seq[0] if maybe_seq else None
        lens = lens_ref[...]                                   # (bb, 1) i32, hoisted

        for l in range(L):                                     # static layer unroll, all VMEM
            whh_l = whh_ref[l]                                 # (Hp, Hp) bf16, hoisted

            # ---- bulk input projection (+ bias fold) for ALL T steps, off the chain ----
            if l == 0:
                xin = x_ref[...]                               # (T*bb, XW) bf16
                w_in_l = win_ref[l][:XW, :]                    # (XW, Hp)
            else:
                xin = seq_scr[...]                             # (T*bb, Hp) bf16
                w_in_l = win_ref[l][:Hp, :]                    # (Hp, Hp)
            pre_scr[...] = jnp.dot(xin, w_in_l,
                                   preferred_element_type=jnp.float32) + b_ref[l]

            # ---- serial recurrence: only h @ W_hh + pre[t] + tanh on the chain ----
            def step(t, h_bf, whh_l=whh_l, l=l):
                row = t * bb
                if not isinstance(t, int):
                    row = pl.multiple_of(row, bb)              # aligned dynamic slice hint
                pre_t = pre_scr[pl.ds(row, bb), :] + jnp.dot(
                    h_bf, whh_l, preferred_element_type=jnp.float32)
                h_new = jnp.tanh(pre_t).astype(jnp.bfloat16)   # bf16 carry (vreg pressure)
                h_out = jnp.where(lens > t, h_new, h_bf)       # freeze past seq length
                if l + 1 < L:                                  # skip dead store on last layer
                    seq_scr[pl.ds(row, bb), :] = h_out
                return h_out

            h0 = jnp.zeros((bb, Hp), jnp.bfloat16)
            if T <= 32:
                h_fin = h0
                for t in range(T):                             # full unroll: small static T
                    h_fin = step(t, h_fin)
            else:
                h_fin = lax.fori_loop(0, T, step, h0, unroll=8)  # bounded unroll for long T
            enc_ref[l] = h_fin.astype(jnp.float32)             # lane-dense 128-wide store

    return kernel


def tower_rnn_pallas(x_rows, lens_pad, w_in, w_hh, b_stack, *, T, b_tile):
    """Run the fused multi-layer RNN.

    x_rows   : (nb*T*b_tile, XW) bf16 lane-padded embeddings, row r of block i is
               (t = (r // b_tile), b = i*b_tile + r % b_tile)
    lens_pad : (B_pad, 1) int32 (0 for padded batch rows)
    w_in     : (L, Din, Hp) bf16; w_hh: (L, Hp, Hp) bf16; b_stack: (L, 1, Hp) f32
    Returns enc_pad: (L, B_pad, Hp) f32 (caller slices to (L, B, H)).
    """
    R, XW = x_rows.shape
    L, Din, Hp = w_in.shape
    B_pad = lens_pad.shape[0]
    nb = B_pad // b_tile
    assert R == nb * T * b_tile

    scratch = [pltpu.VMEM((T * b_tile, Hp), jnp.float32)]            # bulk pre-activation
    if L > 1:
        scratch.append(pltpu.VMEM((T * b_tile, Hp), jnp.bfloat16))   # inter-layer sequence

    kernel = _make_tower_rnn_kernel(L, T, XW, Hp, b_tile)

    enc_pad = pl.pallas_call(
        kernel,
        out_shape=jax.ShapeDtypeStruct((L, B_pad, Hp), jnp.float32),
        grid_spec=pltpu.PrefetchScalarGridSpec(
            num_scalar_prefetch=0,
            grid=(nb,),                                   # batch blocks -> v7x megacore
            in_specs=[
                pl.BlockSpec((T * b_tile, XW), lambda i: (i, 0)),
                pl.BlockSpec((b_tile, 1), lambda i: (i, 0)),
                pl.BlockSpec((L, Din, Hp), lambda i: (0, 0, 0)),
                pl.BlockSpec((L, Hp, Hp), lambda i: (0, 0, 0)),
                pl.BlockSpec((L, 1, Hp), lambda i: (0, 0, 0)),
            ],
            out_specs=pl.BlockSpec((L, b_tile, Hp), lambda i: (0, i, 0)),
            scratch_shapes=scratch,
        ),
        compiler_params=pltpu.CompilerParams(
            dimension_semantics=("parallel",),
            # comfortably under v7x's 64 MiB physical VMEM at these tile sizes
            vmem_limit_bytes=32 * 1024 * 1024,
        ),
    )(x_rows, lens_pad, w_in, w_hh, b_stack)
    return enc_pad


class TowerQueryPallas:
    """JAX/Pallas port of TowerQuery: Embedding + num_layers-deep tanh RNN."""

    def __init__(self, voc, emb, hddn, num_layers=1, key=None):
        if key is None:
            key = jax.random.PRNGKey(42)
        self.emb_dim = emb
        self.hidden_size = hddn
        self.num_layers = num_layers
        keys = jax.random.split(key, 1 + 4 * num_layers)
        # torch.nn.Embedding default init: N(0, 1)
        self.emb_table = jax.random.normal(keys[0], (voc, emb), jnp.float32)
        # torch.nn.RNN default init: U(-1/sqrt(H), 1/sqrt(H)) for all params
        k = 1.0 / math.sqrt(hddn)
        self.layers = []
        for l in range(num_layers):
            in_dim = emb if l == 0 else hddn
            kw = keys[1 + 4 * l: 1 + 4 * (l + 1)]
            w_ih = jax.random.uniform(kw[0], (hddn, in_dim), jnp.float32, -k, k)
            w_hh = jax.random.uniform(kw[1], (hddn, hddn), jnp.float32, -k, k)
            b_ih = jax.random.uniform(kw[2], (hddn,), jnp.float32, -k, k)
            b_hh = jax.random.uniform(kw[3], (hddn,), jnp.float32, -k, k)
            self.layers.append((w_ih, w_hh, b_ih, b_hh))

        # Stack / pad weights ONCE (lane-dense, bf16 MXU operands, zero-padded).
        self.Hp = _round_up(hddn, 128)
        self.XW = _round_up(emb, 128)                 # x-row width fed to the kernel
        Din = max(self.XW, self.Hp)                   # rows of the stacked input weights
        Win, Whh, Bs = [], [], []
        for l, (w_ih, w_hh, b_ih, b_hh) in enumerate(self.layers):
            in_dim = emb if l == 0 else hddn
            wi = jnp.zeros((Din, self.Hp), jnp.float32).at[:in_dim, :hddn].set(w_ih.T)
            wh = jnp.zeros((self.Hp, self.Hp), jnp.float32).at[:hddn, :hddn].set(w_hh.T)
            Win.append(wi)
            Whh.append(wh)
            Bs.append(jnp.zeros((1, self.Hp), jnp.float32).at[0, :hddn].set(b_ih + b_hh))
        self.w_in = jnp.stack(Win).astype(jnp.bfloat16)    # (L, Din, Hp)
        self.w_hh = jnp.stack(Whh).astype(jnp.bfloat16)    # (L, Hp, Hp)
        self.b_stack = jnp.stack(Bs)                       # (L, 1, Hp) f32
        # Lane-padded bf16 embedding table: jnp.take yields MXU-ready rows directly.
        self.emb_padded = jnp.zeros((voc, self.XW), jnp.bfloat16).at[:, :emb].set(
            self.emb_table.astype(jnp.bfloat16))

    def forward(self, padded_tokens, lens):
        """padded_tokens: (B, T) int32 zero-padded (T == max(lens), pad_sequence style).
        lens: (B,) int32.  Returns enc: (num_layers, B, hidden)."""
        B, T = padded_tokens.shape
        b_tile, B_pad, nb = _choose_batch_tiling(B)
        # Gather embeddings straight into the kernel's (batch-block, time, row) layout.
        tok = jnp.pad(padded_tokens.astype(jnp.int32), ((0, B_pad - B), (0, 0)))
        tok_rows = tok.reshape(nb, b_tile, T).transpose(0, 2, 1).reshape(nb * T * b_tile)
        x_rows = jnp.take(self.emb_padded, tok_rows, axis=0)      # (nb*T*b_tile, XW) bf16
        lens_pad = jnp.pad(lens.astype(jnp.int32), (0, B_pad - B)).reshape(B_pad, 1)
        enc_pad = tower_rnn_pallas(x_rows, lens_pad, self.w_in, self.w_hh, self.b_stack,
                                   T=T, b_tile=b_tile)
        return enc_pad[:, :B, :self.hidden_size]


def _reference_forward(model, padded_tokens, lens):
    """Pure-JAX reference mirroring the kernel arithmetic (bf16 operands & hidden carry,
    f32 MXU accumulation, bias folded into the bulk input projection)."""
    emb = jnp.take(model.emb_table.astype(jnp.bfloat16), padded_tokens, axis=0)  # (B,T,E)
    B, T, _ = emb.shape
    x = emb
    finals = []
    for (w_ih, w_hh, b_ih, b_hh) in model.layers:
        wih_b = w_ih.T.astype(jnp.bfloat16)
        whh_b = w_hh.T.astype(jnp.bfloat16)
        bias = (b_ih + b_hh).astype(jnp.float32)
        pre_x = jnp.dot(x.reshape(B * T, -1), wih_b,
                        preferred_element_type=jnp.float32).reshape(B, T, -1) + bias
        h = jnp.zeros((B, model.hidden_size), jnp.bfloat16)
        outs = []
        for t in range(T):
            pre = pre_x[:, t, :] + jnp.dot(h, whh_b, preferred_element_type=jnp.float32)
            h_new = jnp.tanh(pre).astype(jnp.bfloat16)
            h = jnp.where((lens > t)[:, None], h_new, h)
            outs.append(h)
        x = jnp.stack(outs, axis=1)
        finals.append(h.astype(jnp.float32))
    return jnp.stack(finals, axis=0)


if __name__ == "__main__":
    # Small shapes implied by the module: vocab=50, emb=32, hidden=32.
    VOC, EMB, HDDN = 50, 32, 32
    lengths = [5, 8, 3, 6]                    # variable-length queries
    B, T = len(lengths), max(lengths)         # T == max(lens)

    key = jax.random.PRNGKey(0)
    tok_key, p1, p2 = jax.random.split(key, 3)
    tokens = jax.random.randint(tok_key, (B, T), 0, VOC, dtype=jnp.int32)
    lens = jnp.array(lengths, dtype=jnp.int32)
    # zero-pad beyond each length (same as pad_sequence's padding_value=0)
    pos = jnp.arange(T)[None, :]
    padded_tokens = jnp.where(pos < lens[:, None], tokens, 0)

    for num_layers, pkey in ((1, p1), (2, p2)):
        model = TowerQueryPallas(VOC, EMB, HDDN, num_layers=num_layers, key=pkey)
        enc = jax.block_until_ready(model.forward(padded_tokens, lens))
        assert enc.shape == (num_layers, B, HDDN), enc.shape
        enc_ref = _reference_forward(model, padded_tokens, lens)
        err = float(jnp.max(jnp.abs(enc - enc_ref)))
        # bf16-operand / bf16-carry arithmetic: allow a few bf16 ulps of drift
        assert jnp.allclose(enc, enc_ref, atol=2e-2, rtol=2e-2), err

    print("KERNEL_OK")
</pallas_src>

<mosaic_0001>
module attributes {stable_mosaic.version = 11 : i64} {
  func.func @kernel(%arg0: i32, %arg1: memref<128x128xbf16, #tpu.memory_space<vmem>>, %arg2: memref<16x1xi32, #tpu.memory_space<vmem>>, %arg3: memref<1x128x128xbf16, #tpu.memory_space<vmem>>, %arg4: memref<1x128x128xbf16, #tpu.memory_space<vmem>>, %arg5: memref<1x1x128xf32, #tpu.memory_space<vmem>>, %arg6: memref<1x16x128xf32, #tpu.memory_space<vmem>>, %arg7: memref<128x128xf32, #tpu.memory_space<vmem>>) attributes {dimension_semantics = [#tpu.dimension_semantics<parallel>], iteration_bounds = array<i64: 1>, scalar_prefetch = 0 : i64, scratch_operands = 1 : i64, tpu.core_type = #tpu.core_type<tc>, window_params = [{transform_indices = @transform_0, window_bounds = array<i64: 128, 128>}, {transform_indices = @transform_1, window_bounds = array<i64: 16, 1>}, {pipeline_mode = #tpu.pipeline_mode<synchronous>, transform_indices = @transform_2, window_bounds = array<i64: 1, 128, 128>}, {pipeline_mode = #tpu.pipeline_mode<synchronous>, transform_indices = @transform_3, window_bounds = array<i64: 1, 128, 128>}, {pipeline_mode = #tpu.pipeline_mode<synchronous>, transform_indices = @transform_4, window_bounds = array<i64: 1, 1, 128>}, {transform_indices = @transform_5, window_bounds = array<i64: 1, 16, 128>}]} {
    %c0 = arith.constant 0 : index
    %c0_0 = arith.constant 0 : index
    %0 = vector.load %arg2[%c0, %c0_0] : memref<16x1xi32, #tpu.memory_space<vmem>>, vector<16x1xi32>
    %c0_1 = arith.constant 0 : index
    %c0_2 = arith.constant 0 : index
    %c0_3 = arith.constant 0 : index
    %1 = vector.load %arg4[%c0_1, %c0_2, %c0_3] : memref<1x128x128xbf16, #tpu.memory_space<vmem>>, vector<1x128x128xbf16>
    %2 = vector.shape_cast %1 : vector<1x128x128xbf16> to vector<128x128xbf16>
    %c0_4 = arith.constant 0 : index
    %c0_5 = arith.constant 0 : index
    %3 = vector.load %arg1[%c0_4, %c0_5] : memref<128x128xbf16, #tpu.memory_space<vmem>>, vector<128x128xbf16>
    %c0_6 = arith.constant 0 : index
    %c0_7 = arith.constant 0 : index
    %c0_8 = arith.constant 0 : index
    %4 = vector.load %arg3[%c0_6, %c0_7, %c0_8] : memref<1x128x128xbf16, #tpu.memory_space<vmem>>, vector<1x128x128xbf16>
    %5 = vector.shape_cast %4 : vector<1x128x128xbf16> to vector<128x128xbf16>
    %cst = arith.constant dense<0.000000e+00> : vector<128x128xf32>
    %6 = tpu.matmul %3, %5, %cst {dimension_numbers = #tpu.dot_dimension_numbers<[1], [0], [0], [1], [0, 0, 1, 1], [], []>} : vector<128x128xbf16>, vector<128x128xbf16>, vector<128x128xf32> -> vector<128x128xf32>
    %c0_9 = arith.constant 0 : index
    %c0_10 = arith.constant 0 : index
    %c0_11 = arith.constant 0 : index
    %7 = vector.load %arg5[%c0_9, %c0_10, %c0_11] : memref<1x1x128xf32, #tpu.memory_space<vmem>>, vector<1x1x128xf32>
    %8 = vector.shape_cast %7 : vector<1x1x128xf32> to vector<1x128xf32>
    %9 = vector.broadcast %8 : vector<1x128xf32> to vector<128x128xf32>
    %10 = arith.addf %6, %9 : vector<128x128xf32>
    %c0_12 = arith.constant 0 : index
    %c0_13 = arith.constant 0 : index
    %11 = vector.load %arg7[%c0_12, %c0_13] : memref<128x128xf32, #tpu.memory_space<vmem>>, vector<128x128xf32>
    tpu.vector_store %arg7[%c0_12, %c0_13], %10 {strides = array<i32>} : memref<128x128xf32, #tpu.memory_space<vmem>>, vector<128x128xf32>,
    %cst_14 = arith.constant 0.000000e+00 : bf16
    %12 = vector.broadcast %cst_14 : bf16 to vector<16x128xbf16>
    %c0_15 = arith.constant 0 : index
    %c0_16 = arith.constant 0 : index
    %13 = vector.load %arg7[%c0_15, %c0_16] : memref<128x128xf32, #tpu.memory_space<vmem>>, vector<16x128xf32>
    %cst_17 = arith.constant dense<0.000000e+00> : vector<16x128xf32>
    %14 = tpu.matmul %12, %2, %cst_17 {dimension_numbers = #tpu.dot_dimension_numbers<[1], [0], [0], [1], [0, 0, 1, 1], [], []>} : vector<16x128xbf16>, vector<128x128xbf16>, vector<16x128xf32> -> vector<16x128xf32>
    %15 = arith.addf %13, %14 : vector<16x128xf32>
    %16 = math.tanh %15 : vector<16x128xf32>
    %17 = arith.truncf %16 : vector<16x128xf32> to vector<16x128xbf16>
    %c0_i32 = arith.constant 0 : i32
    %18 = vector.broadcast %c0_i32 : i32 to vector<16x1xi32>
    %19 = arith.cmpi sgt, %0, %18 : vector<16x1xi32>
    %20 = vector.shape_cast %19 : vector<16x1xi1> to vector<16x1xi1>
    %21 = vector.broadcast %20 : vector<16x1xi1> to vector<16x128xi1>
    %22 = arith.select %21, %17, %12 : vector<16x128xi1>, vector<16x128xbf16>
    %c16 = arith.constant 16 : index
    %c0_18 = arith.constant 0 : index
    %23 = vector.load %arg7[%c16, %c0_18] : memref<128x128xf32, #tpu.memory_space<vmem>>, vector<16x128xf32>
    %cst_19 = arith.constant dense<0.000000e+00> : vector<16x128xf32>
    %24 = tpu.matmul %22, %2, %cst_19 {dimension_numbers = #tpu.dot_dimension_numbers<[1], [0], [0], [1], [0, 0, 1, 1], [], []>} : vector<16x128xbf16>, vector<128x128xbf16>, vector<16x128xf32> -> vector<16x128xf32>
    %25 = arith.addf %23, %24 : vector<16x128xf32>
    %26 = math.tanh %25 : vector<16x128xf32>
    %27 = arith.truncf %26 : vector<16x128xf32> to vector<16x128xbf16>
    %c1_i32 = arith.constant 1 : i32
    %28 = vector.broadcast %c1_i32 : i32 to vector<16x1xi32>
    %29 = arith.cmpi sgt, %0, %28 : vector<16x1xi32>
    %30 = vector.shape_cast %29 : vector<16x1xi1> to vector<16x1xi1>
    %31 = vector.broadcast %30 : vector<16x1xi1> to vector<16x128xi1>
    %32 = arith.select %31, %27, %22 : vector<16x128xi1>, vector<16x128xbf16>
    %c32 = arith.constant 32 : index
    %c0_20 = arith.constant 0 : index
    %33 = vector.load %arg7[%c32, %c0_20] : memref<128x128xf32, #tpu.memory_space<vmem>>, vector<16x128xf32>
    %cst_21 = arith.constant dense<0.000000e+00> : vector<16x128xf32>
    %34 = tpu.matmul %32, %2, %cst_21 {dimension_numbers = #tpu.dot_dimension_numbers<[1], [0], [0], [1], [0, 0, 1, 1], [], []>} : vector<16x128xbf16>, vector<128x128xbf16>, vector<16x128xf32> -> vector<16x128xf32>
    %35 = arith.addf %33, %34 : vector<16x128xf32>
    %36 = math.tanh %35 : vector<16x128xf32>
    %37 = arith.truncf %36 : vector<16x128xf32> to vector<16x128xbf16>
    %c2_i32 = arith.constant 2 : i32
    %38 = vector.broadcast %c2_i32 : i32 to vector<16x1xi32>
    %39 = arith.cmpi sgt, %0, %38 : vector<16x1xi32>
    %40 = vector.shape_cast %39 : vector<16x1xi1> to vector<16x1xi1>
    %41 = vector.broadcast %40 : vector<16x1xi1> to vector<16x128xi1>
    %42 = arith.select %41, %37, %32 : vector<16x128xi1>, vector<16x128xbf16>
    %c48 = arith.constant 48 : index
    %c0_22 = arith.constant 0 : index
    %43 = vector.load %arg7[%c48, %c0_22] : memref<128x128xf32, #tpu.memory_space<vmem>>, vector<16x128xf32>
    %cst_23 = arith.constant dense<0.000000e+00> : vector<16x128xf32>
    %44 = tpu.matmul %42, %2, %cst_23 {dimension_numbers = #tpu.dot_dimension_numbers<[1], [0], [0], [1], [0, 0, 1, 1], [], []>} : vector<16x128xbf16>, vector<128x128xbf16>, vector<16x128xf32> -> vector<16x128xf32>
    %45 = arith.addf %43, %44 : vector<16x128xf32>
    %46 = math.tanh %45 : vector<16x128xf32>
    %47 = arith.truncf %46 : vector<16x128xf32> to vector<16x128xbf16>
    %c3_i32 = arith.constant 3 : i32
    %48 = vector.broadcast %c3_i32 : i32 to vector<16x1xi32>
    %49 = arith.cmpi sgt, %0, %48 : vector<16x1xi32>
    %50 = vector.shape_cast %49 : vector<16x1xi1> to vector<16x1xi1>
    %51 = vector.broadcast %50 : vector<16x1xi1> to vector<16x128xi1>
    %52 = arith.select %51, %47, %42 : vector<16x128xi1>, vector<16x128xbf16>
    %c64 = arith.constant 64 : index
    %c0_24 = arith.constant 0 : index
    %53 = vector.load %arg7[%c64, %c0_24] : memref<128x128xf32, #tpu.memory_space<vmem>>, vector<16x128xf32>
    %cst_25 = arith.constant dense<0.000000e+00> : vector<16x128xf32>
    %54 = tpu.matmul %52, %2, %cst_25 {dimension_numbers = #tpu.dot_dimension_numbers<[1], [0], [0], [1], [0, 0, 1, 1], [], []>} : vector<16x128xbf16>, vector<128x128xbf16>, vector<16x128xf32> -> vector<16x128xf32>
    %55 = arith.addf %53, %54 : vector<16x128xf32>
    %56 = math.tanh %55 : vector<16x128xf32>
    %57 = arith.truncf %56 : vector<16x128xf32> to vector<16x128xbf16>
    %c4_i32 = arith.constant 4 : i32
    %58 = vector.broadcast %c4_i32 : i32 to vector<16x1xi32>
    %59 = arith.cmpi sgt, %0, %58 : vector<16x1xi32>
    %60 = vector.shape_cast %59 : vector<16x1xi1> to vector<16x1xi1>
    %61 = vector.broadcast %60 : vector<16x1xi1> to vector<16x128xi1>
    %62 = arith.select %61, %57, %52 : vector<16x128xi1>, vector<16x128xbf16>
    %c80 = arith.constant 80 : index
    %c0_26 = arith.constant 0 : index
    %63 = vector.load %arg7[%c80, %c0_26] : memref<128x128xf32, #tpu.memory_space<vmem>>, vector<16x128xf32>
    %cst_27 = arith.constant dense<0.000000e+00> : vector<16x128xf32>
    %64 = tpu.matmul %62, %2, %cst_27 {dimension_numbers = #tpu.dot_dimension_numbers<[1], [0], [0], [1], [0, 0, 1, 1], [], []>} : vector<16x128xbf16>, vector<128x128xbf16>, vector<16x128xf32> -> vector<16x128xf32>
    %65 = arith.addf %63, %64 : vector<16x128xf32>
    %66 = math.tanh %65 : vector<16x128xf32>
    %67 = arith.truncf %66 : vector<16x128xf32> to vector<16x128xbf16>
    %c5_i32 = arith.constant 5 : i32
    %68 = vector.broadcast %c5_i32 : i32 to vector<16x1xi32>
    %69 = arith.cmpi sgt, %0, %68 : vector<16x1xi32>
    %70 = vector.shape_cast %69 : vector<16x1xi1> to vector<16x1xi1>
    %71 = vector.broadcast %70 : vector<16x1xi1> to vector<16x128xi1>
    %72 = arith.select %71, %67, %62 : vector<16x128xi1>, vector<16x128xbf16>
    %c96 = arith.constant 96 : index
    %c0_28 = arith.constant 0 : index
    %73 = vector.load %arg7[%c96, %c0_28] : memref<128x128xf32, #tpu.memory_space<vmem>>, vector<16x128xf32>
    %cst_29 = arith.constant dense<0.000000e+00> : vector<16x128xf32>
    %74 = tpu.matmul %72, %2, %cst_29 {dimension_numbers = #tpu.dot_dimension_numbers<[1], [0], [0], [1], [0, 0, 1, 1], [], []>} : vector<16x128xbf16>, vector<128x128xbf16>, vector<16x128xf32> -> vector<16x128xf32>
    %75 = arith.addf %73, %74 : vector<16x128xf32>
    %76 = math.tanh %75 : vector<16x128xf32>
    %77 = arith.truncf %76 : vector<16x128xf32> to vector<16x128xbf16>
    %c6_i32 = arith.constant 6 : i32
    %78 = vector.broadcast %c6_i32 : i32 to vector<16x1xi32>
    %79 = arith.cmpi sgt, %0, %78 : vector<16x1xi32>
    %80 = vector.shape_cast %79 : vector<16x1xi1> to vector<16x1xi1>
    %81 = vector.broadcast %80 : vector<16x1xi1> to vector<16x128xi1>
    %82 = arith.select %81, %77, %72 : vector<16x128xi1>, vector<16x128xbf16>
    %c112 = arith.constant 112 : index
    %c0_30 = arith.constant 0 : index
    %83 = vector.load %arg7[%c112, %c0_30] : memref<128x128xf32, #tpu.memory_space<vmem>>, vector<16x128xf32>
    %cst_31 = arith.constant dense<0.000000e+00> : vector<16x128xf32>
    %84 = tpu.matmul %82, %2, %cst_31 {dimension_numbers = #tpu.dot_dimension_numbers<[1], [0], [0], [1], [0, 0, 1, 1], [], []>} : vector<16x128xbf16>, vector<128x128xbf16>, vector<16x128xf32> -> vector<16x128xf32>
    %85 = arith.addf %83, %84 : vector<16x128xf32>
    %86 = math.tanh %85 : vector<16x128xf32>
    %87 = arith.truncf %86 : vector<16x128xf32> to vector<16x128xbf16>
    %c7_i32 = arith.constant 7 : i32
    %88 = vector.broadcast %c7_i32 : i32 to vector<16x1xi32>
    %89 = arith.cmpi sgt, %0, %88 : vector<16x1xi32>
    %90 = vector.shape_cast %89 : vector<16x1xi1> to vector<16x1xi1>
    %91 = vector.broadcast %90 : vector<16x1xi1> to vector<16x128xi1>
    %92 = arith.select %91, %87, %82 : vector<16x128xi1>, vector<16x128xbf16>
    %93 = arith.extf %92 : vector<16x128xbf16> to vector<16x128xf32>
    %c0_32 = arith.constant 0 : index
    %c0_33 = arith.constant 0 : index
    %c0_34 = arith.constant 0 : index
    %94 = vector.load %arg6[%c0_32, %c0_33, %c0_34] : memref<1x16x128xf32, #tpu.memory_space<vmem>>, vector<1x16x128xf32>
    %95 = vector.shape_cast %94 : vector<1x16x128xf32> to vector<16x128xf32>
    %96 = vector.shape_cast %93 : vector<16x128xf32> to vector<1x16x128xf32>
    tpu.vector_store %arg6[%c0_32, %c0_33, %c0_34], %96 {strides = array<i32>} : memref<1x16x128xf32, #tpu.memory_space<vmem>>, vector<1x16x128xf32>,
    return
  }
  func.func @transform_0(%arg0: i32) -> (i32, i32) {
    %c0_i32 = arith.constant 0 : i32
    %c0_i32_0 = arith.constant 0 : i32
    return %arg0, %c0_i32 : i32, i32
  }
  func.func @transform_1(%arg0: i32) -> (i32, i32) {
    %c0_i32 = arith.constant 0 : i32
    %c0_i32_0 = arith.constant 0 : i32
    return %arg0, %c0_i32 : i32, i32
  }
  func.func @transform_2(%arg0: i32) -> (i32, i32, i32) {
    %c0_i32 = arith.constant 0 : i32
    %c0_i32_0 = arith.constant 0 : i32
    %c0_i32_1 = arith.constant 0 : i32
    %c0_i32_2 = arith.constant 0 : i32
    return %c0_i32, %c0_i32_0, %c0_i32_1 : i32, i32, i32
  }
  func.func @transform_3(%arg0: i32) -> (i32, i32, i32) {
    %c0_i32 = arith.constant 0 : i32
    %c0_i32_0 = arith.constant 0 : i32
    %c0_i32_1 = arith.constant 0 : i32
    %c0_i32_2 = arith.constant 0 : i32
    return %c0_i32, %c0_i32_0, %c0_i32_1 : i32, i32, i32
  }
  func.func @transform_4(%arg0: i32) -> (i32, i32, i32) {
    %c0_i32 = arith.constant 0 : i32
    %c0_i32_0 = arith.constant 0 : i32
    %c0_i32_1 = arith.constant 0 : i32
    %c0_i32_2 = arith.constant 0 : i32
    return %c0_i32, %c0_i32_0, %c0_i32_1 : i32, i32, i32
  }
  func.func @transform_5(%arg0: i32) -> (i32, i32, i32) {
    %c0_i32 = arith.constant 0 : i32
    %c0_i32_0 = arith.constant 0 : i32
    %c0_i32_1 = arith.constant 0 : i32
    return %c0_i32, %arg0, %c0_i32_0 : i32, i32, i32
  }
}

</mosaic_0001>

<llo_original>
// kernel: tpu_custom_call.1
$region0: #{tpu_custom_call.1}
  #allocation0 [shape = 'u32[]', space=smem, size = 0x4, offset = 0x4, fixed_abs, tag = 'smem constant byte address 0x4 - core index']
  #allocation1 [shape = 'u32[72,128]{1,0:T(1,128)}', space=vmem, size = 0x9000, scoped, tag = 'internal scratch']
  #allocation2 [shape = 'f32[128,128]{1,0:T(8,128)}', space=vmem, size = 0x10000, scoped, tag = 'scratch operand']
  %s0 = inlined_call_operand.hbm [shape: bf16[128,128], index: 0, kind: input, shape index: {}]
  %s1 = inlined_call_operand.vmem [shape: s32[16,1], index: 1, kind: input, shape index: {}]
  %s2 = inlined_call_operand.hbm [shape: bf16[1,128,128], index: 2, kind: input, shape index: {}]
  %s3 = inlined_call_operand.hbm [shape: bf16[1,128,128], index: 3, kind: input, shape index: {}]
  %s4 = inlined_call_operand.vmem [shape: f32[1,1,128], index: 4, kind: input, shape index: {}]
  %s5 = inlined_call_operand.hbm [shape: f32[1,16,128], index: 5, kind: output, shape index: {}]
  %s6 = sld [smem:[#allocation0]]
  $region42: #{tpu_custom_call.1} parent=0
    _
  %s8 = ssub.s32 1, %s6
  %s9 = scalar_select 0, %s8, %s6
  $region1: #{tpu_custom_call.1} parent=0
    #allocation3 [shape = 'u8[32768]{0}', space=vmem, size = 0x8000, scoped, tag = 'input window, operand 0, single buffered']
    #allocation4 [shape = 's32[1]{0}', space=sflag, size = 0x4, scoped, tag = 'scoped memory for tpu_custom_call.1']
    #allocation5 [shape = 's32[1]{0}', space=sflag, size = 0x4, scoped, tag = 'scoped memory for tpu_custom_call.1']
    #allocation6 [shape = 'u8[32768]{0}', space=vmem, size = 0x8000, scoped, tag = 'input window, operand 2, single buffered']
    #allocation7 [shape = 's32[1]{0}', space=sflag, size = 0x4, scoped, tag = 'scoped memory for tpu_custom_call.1']
    #allocation8 [shape = 'u8[32768]{0}', space=vmem, size = 0x8000, scoped, tag = 'input window, operand 3, single buffered']
    #allocation9 [shape = 'u8[8192]{0}', space=vmem, size = 0x2000, scoped, tag = 'output window, operand 0, single buffered']
    %10 = vsyncpa [#allocation4], 0
    %11 = vsyncpa [#allocation7], 0
    %12 = vsyncpa [#allocation5], 0
    // Predicated region
    $region2: #{tpu_custom_call.1} parent=1 // pred_check
      _
    $region3: #{tpu_custom_call.1} parent=1 // pred_check_branch
      %14 = sbr.rel (0) target = $region5
    $region4: #{tpu_custom_call.1} parent=1 // pred_region
      %16 = vsyncadd [#allocation4], 0
      %s17 = sshll.u32 %s0, 4
      %s18 = int_to_ptr.hbm [resolvable:$true] %s17
      %s19 = sshll.u32 [#allocation3], 4
      %s20 = int_to_ptr.vmem [resolvable:$true] %s19
      %25 = dma.hbm_to_vmem [thread:$0]  %s18, 1024, %s20, [#allocation4], 64, 64, 4
    $region5: #{tpu_custom_call.1} parent=1 // pred_fallthru
      _
    // Predicated region
    $region6: #{tpu_custom_call.1} parent=1 // pred_check
      _
    $region7: #{tpu_custom_call.1} parent=1 // pred_check_branch
      %27 = sbr.rel (0) target = $region9
    $region8: #{tpu_custom_call.1} parent=1 // pred_region
      _
    $region9: #{tpu_custom_call.1} parent=1 // pred_fallthru
      _
    // Predicated region
    $region10: #{tpu_custom_call.1} parent=1 // pred_check
      _
    $region11: #{tpu_custom_call.1} parent=1 // pred_check_branch
      %29 = sbr.rel (0) target = $region13
    $region12: #{tpu_custom_call.1} parent=1 // pred_region
      %31 = vsyncadd [#allocation7], 0
      %s32 = sshll.u32 %s2, 4
      %s33 = int_to_ptr.hbm [resolvable:$true] %s32
      %s34 = sshll.u32 [#allocation6], 4
      %s35 = int_to_ptr.vmem [resolvable:$true] %s34
      %40 = dma.hbm_to_vmem [thread:$0]  %s33, 1024, %s35, [#allocation7], 64, 64, 4
    $region13: #{tpu_custom_call.1} parent=1 // pred_fallthru
      _
    // Predicated region
    $region14: #{tpu_custom_call.1} parent=1 // pred_check
      _
    $region15: #{tpu_custom_call.1} parent=1 // pred_check_branch
      %42 = sbr.rel (0) target = $region17
    $region16: #{tpu_custom_call.1} parent=1 // pred_region
      %44 = vsyncadd [#allocation7], 0
      %s45 = sshll.u32 %s3, 4
      %s46 = int_to_ptr.hbm [resolvable:$true] %s45
      %s47 = sshll.u32 [#allocation8], 4
      %s48 = int_to_ptr.vmem [resolvable:$true] %s47
      %53 = dma.hbm_to_vmem [thread:$0]  %s46, 1024, %s48, [#allocation7], 64, 64, 4
    $region17: #{tpu_custom_call.1} parent=1 // pred_fallthru
      _
    // Predicated region
    $region18: #{tpu_custom_call.1} parent=1 // pred_check
      _
    $region19: #{tpu_custom_call.1} parent=1 // pred_check_branch
      %55 = sbr.rel (0) target = $region21
    $region20: #{tpu_custom_call.1} parent=1 // pred_region
      _
    $region21: #{tpu_custom_call.1} parent=1 // pred_fallthru
      _
    // Predicated region
    $region22: #{tpu_custom_call.1} parent=1 // pred_check
      _
    $region23: #{tpu_custom_call.1} parent=1 // pred_check_branch
      %57 = sbr.rel (0) target = $region25
    $region24: #{tpu_custom_call.1} parent=1 // pred_region
      %59 = dma.done [#allocation4], 1024
    $region25: #{tpu_custom_call.1} parent=1 // pred_fallthru
      _
    // Predicated region
    $region26: #{tpu_custom_call.1} parent=1 // pred_check
      _
    $region27: #{tpu_custom_call.1} parent=1 // pred_check_branch
      %61 = sbr.rel (0) target = $region29
    $region28: #{tpu_custom_call.1} parent=1 // pred_region
      %63 = dma.done [#allocation7], 1024
    $region29: #{tpu_custom_call.1} parent=1 // pred_fallthru
      _
    // Predicated region
    $region30: #{tpu_custom_call.1} parent=1 // pred_check
      _
    $region31: #{tpu_custom_call.1} parent=1 // pred_check_branch
      %65 = sbr.rel (0) target = $region33
    $region32: #{tpu_custom_call.1} parent=1 // pred_region
      %67 = dma.done [#allocation7], 1024
    $region33: #{tpu_custom_call.1} parent=1 // pred_fallthru
      _
    %v69 = vld [vmem:[%s1] sm:$0xff]
    %v70 = vld [vmem:[%s1 + $0x8] sm:$0xff]
    %v71 = vld [vmem:[#allocation8] sm:$0xf]
    %v72 = vld [vmem:[#allocation8 + $0x4] sm:$0xf]
    %v73 = vld [vmem:[#allocation8 + $0x8] sm:$0xf]
    %v74 = vld [vmem:[#allocation8 + $0xc] sm:$0xf]
    %v75 = vld [vmem:[#allocation8 + $0x10] sm:$0xf]
    %v76 = vld [vmem:[#allocation8 + $0x14] sm:$0xf]
    %v77 = vld [vmem:[#allocation8 + $0x18] sm:$0xf]
    %v78 = vld [vmem:[#allocation8 + $0x1c] sm:$0xf]
    %v79 = vld [vmem:[#allocation8 + $0x20] sm:$0xf]
    %v80 = vld [vmem:[#allocation8 + $0x24] sm:$0xf]
    %v81 = vld [vmem:[#allocation8 + $0x28] sm:$0xf]
    %v82 = vld [vmem:[#allocation8 + $0x2c] sm:$0xf]
    %v83 = vld [vmem:[#allocation8 + $0x30] sm:$0xf]
    %v84 = vld [vmem:[#allocation8 + $0x34] sm:$0xf]
    %v85 = vld [vmem:[#allocation8 + $0x38] sm:$0xf]
    %v86 = vld [vmem:[#allocation8 + $0x3c] sm:$0xf]
    %v87 = vld [vmem:[#allocation3] sm:$0xf]
    %v88 = vld [vmem:[#allocation3 + $0x4] sm:$0xf]
    %v89 = vld [vmem:[#allocation3 + $0x8] sm:$0xf]
    %v90 = vld [vmem:[#allocation3 + $0xc] sm:$0xf]
    %v91 = vld [vmem:[#allocation3 + $0x10] sm:$0xf]
    %v92 = vld [vmem:[#allocation3 + $0x14] sm:$0xf]
    %v93 = vld [vmem:[#allocation3 + $0x18] sm:$0xf]
    %v94 = vld [vmem:[#allocation3 + $0x1c] sm:$0xf]
    %v95 = vld [vmem:[#allocation3 + $0x20] sm:$0xf]
    %v96 = vld [vmem:[#allocation3 + $0x24] sm:$0xf]
    %v97 = vld [vmem:[#allocation3 + $0x28] sm:$0xf]
    %v98 = vld [vmem:[#allocation3 + $0x2c] sm:$0xf]
    %v99 = vld [vmem:[#allocation3 + $0x30] sm:$0xf]
    %v100 = vld [vmem:[#allocation3 + $0x34] sm:$0xf]
    %v101 = vld [vmem:[#allocation3 + $0x38] sm:$0xf]
    %v102 = vld [vmem:[#allocation3 + $0x3c] sm:$0xf]
    %v103 = vld [vmem:[#allocation6] sm:$0xf]
    %v104 = vld [vmem:[#allocation6 + $0x4] sm:$0xf]
    %v105 = vld [vmem:[#allocation6 + $0x8] sm:$0xf]
    %v106 = vld [vmem:[#allocation6 + $0xc] sm:$0xf]
    %v107 = vld [vmem:[#allocation6 + $0x10] sm:$0xf]
    %v108 = vld [vmem:[#allocation6 + $0x14] sm:$0xf]
    %v109 = vld [vmem:[#allocation6 + $0x18] sm:$0xf]
    %v110 = vld [vmem:[#allocation6 + $0x1c] sm:$0xf]
    %v111 = vld [vmem:[#allocation6 + $0x20] sm:$0xf]
    %v112 = vld [vmem:[#allocation6 + $0x24] sm:$0xf]
    %v113 = vld [vmem:[#allocation6 + $0x28] sm:$0xf]
    %v114 = vld [vmem:[#allocation6 + $0x2c] sm:$0xf]
    %v115 = vld [vmem:[#allocation6 + $0x30] sm:$0xf]
    %v116 = vld [vmem:[#allocation6 + $0x34] sm:$0xf]
    %v117 = vld [vmem:[#allocation6 + $0x38] sm:$0xf]
    %v118 = vld [vmem:[#allocation6 + $0x3c] sm:$0xf]
    %v119 = vld [vmem:[%s4] sm:$0x1]
    %v121 = vperm.slane %v119, 0
    %v139 = vunpack.c.l.b16 %v87
    %v140 = vunpack.c.l.b16 %v88
    %v141 = vunpack.c.l.b16 %v89
    %v142 = vunpack.c.l.b16 %v90
    %v143 = vunpack.c.l.b16 %v91
    %v144 = vunpack.c.l.b16 %v92
    %v145 = vunpack.c.l.b16 %v93
    %v146 = vunpack.c.l.b16 %v94
    %v147 = vunpack.c.l.b16 %v95
    %v148 = vunpack.c.l.b16 %v96
    %v149 = vunpack.c.l.b16 %v97
    %v150 = vunpack.c.l.b16 %v98
    %v151 = vunpack.c.l.b16 %v99
    %v152 = vunpack.c.l.b16 %v100
    %v153 = vunpack.c.l.b16 %v101
    %v154 = vunpack.c.l.b16 %v102
    %v155 = vpack.c.b16 %v140, %v139
    %v156 = vpack.c.b16 %v142, %v141
    %v157 = vpack.c.b16 %v144, %v143
    %v158 = vpack.c.b16 %v146, %v145
    %v159 = vpack.c.b16 %v148, %v147
    %v160 = vpack.c.b16 %v150, %v149
    %v161 = vpack.c.b16 %v152, %v151
    %v162 = vpack.c.b16 %v154, %v153
    %v187 = vunpack.c.l.b16 %v103
    %v188 = vunpack.c.l.b16 %v104
    %v189 = vunpack.c.l.b16 %v105
    %v190 = vunpack.c.l.b16 %v106
    %v191 = vunpack.c.l.b16 %v107
    %v192 = vunpack.c.l.b16 %v108
    %v193 = vunpack.c.l.b16 %v109
    %v194 = vunpack.c.l.b16 %v110
    %v195 = vunpack.c.l.b16 %v111
    %v196 = vunpack.c.l.b16 %v112
    %v197 = vunpack.c.l.b16 %v113
    %v198 = vunpack.c.l.b16 %v114
    %v199 = vunpack.c.l.b16 %v115
    %v200 = vunpack.c.l.b16 %v116
    %v201 = vunpack.c.l.b16 %v117
    %v202 = vunpack.c.l.b16 %v118
    %v203 = vpack.c.b16 %v188, %v187
    %v204 = vpack.c.b16 %v190, %v189
    %v205 = vpack.c.b16 %v192, %v191
    %v206 = vpack.c.b16 %v194, %v193
    %v207 = vpack.c.b16 %v196, %v195
    %v208 = vpack.c.b16 %v198, %v197
    %v209 = vpack.c.b16 %v200, %v199
    %v210 = vpack.c.b16 %v202, %v201
    %219 = vmatpush.bf16.msra.mxu0 %v210
    %220 = vmatpush.bf16.msra.mxu0 %v209
    %221 = vmatpush.bf16.msra.mxu0 %v208
    %222 = vmatpush.bf16.msra.mxu0 %v207
    %223 = vmatpush.bf16.msra.mxu0 %v206
    %224 = vmatpush.bf16.msra.mxu0 %v205
    %225 = vmatpush.bf16.msra.mxu0 %v204
    %226 = vmatpush.bf16.msra.mxu0 %v203
    %227 = vmatmul.bf16.gmra.mxu0 %v155
    %v228 = vpop.f32.mrf.mxu0
    %v229 = vadd.f32 %v121, %v228
    %v230 = vpop.f32.mrf.mxu0
    %v231 = vadd.f32 %v121, %v230
    %232 = vmatmul.bf16.gmra.mxu0 %v156
    %v233 = vpop.f32.mrf.mxu0
    %v234 = vadd.f32 %v121, %v233
    %v235 = vpop.f32.mrf.mxu0
    %v236 = vadd.f32 %v121, %v235
    %237 = vmatmul.bf16.gmra.mxu0 %v157
    %v238 = vpop.f32.mrf.mxu0
    %v239 = vadd.f32 %v121, %v238
    %v240 = vpop.f32.mrf.mxu0
    %v241 = vadd.f32 %v121, %v240
    %242 = vmatmul.bf16.gmra.mxu0 %v158
    %v243 = vpop.f32.mrf.mxu0
    %v244 = vadd.f32 %v121, %v243
    %v245 = vpop.f32.mrf.mxu0
    %v246 = vadd.f32 %v121, %v245
    %247 = vmatmul.bf16.gmra.mxu0 %v159
    %v248 = vpop.f32.mrf.mxu0
    %v249 = vadd.f32 %v121, %v248
    %v250 = vpop.f32.mrf.mxu0
    %v251 = vadd.f32 %v121, %v250
    %252 = vmatmul.bf16.gmra.mxu0 %v160
    %v253 = vpop.f32.mrf.mxu0
    %v254 = vadd.f32 %v121, %v253
    %v255 = vpop.f32.mrf.mxu0
    %v256 = vadd.f32 %v121, %v255
    %257 = vmatmul.bf16.gmra.mxu0 %v161
    %v258 = vpop.f32.mrf.mxu0
    %v259 = vadd.f32 %v121, %v258
    %v260 = vpop.f32.mrf.mxu0
    %v261 = vadd.f32 %v121, %v260
    %262 = vmatmul.bf16.gmra.mxu0 %v162
    %v263 = vpop.f32.mrf.mxu0
    %v264 = vadd.f32 %v121, %v263
    %v265 = vpop.f32.mrf.mxu0
    %v266 = vadd.f32 %v121, %v265
    %267 = vdwg.mxu0
    %268 = vst [vmem:[#allocation2] sm:$0xff] %v229
    %269 = vst [vmem:[#allocation2 + $0x8] sm:$0xff] %v231
    %270 = vst [vmem:[#allocation2 + $0x10] sm:$0xff] %v234
    %271 = vst [vmem:[#allocation2 + $0x18] sm:$0xff] %v236
    %272 = vst [vmem:[#allocation2 + $0x20] sm:$0xff] %v239
    %273 = vst [vmem:[#allocation2 + $0x28] sm:$0xff] %v241
    %274 = vst [vmem:[#allocation2 + $0x30] sm:$0xff] %v244
    %275 = vst [vmem:[#allocation2 + $0x38] sm:$0xff] %v246
    %276 = vst [vmem:[#allocation2 + $0x40] sm:$0xff] %v249
    %277 = vst [vmem:[#allocation2 + $0x48] sm:$0xff] %v251
    %278 = vst [vmem:[#allocation2 + $0x50] sm:$0xff] %v254
    %279 = vst [vmem:[#allocation2 + $0x58] sm:$0xff] %v256
    %280 = vst [vmem:[#allocation2 + $0x60] sm:$0xff] %v259
    %281 = vst [vmem:[#allocation2 + $0x68] sm:$0xff] %v261
    %282 = vst [vmem:[#allocation2 + $0x70] sm:$0xff] %v264
    %283 = vst [vmem:[#allocation2 + $0x78] sm:$0xff] %v266
    %v284 = vld [vmem:[#allocation2] sm:$0xff]
    %v285 = vld [vmem:[#allocation2 + $0x8] sm:$0xff]
    %v302 = vunpack.c.l.b16 %v71
    %v303 = vunpack.c.l.b16 %v72
    %v304 = vunpack.c.l.b16 %v73
    %v305 = vunpack.c.l.b16 %v74
    %v306 = vunpack.c.l.b16 %v75
    %v307 = vunpack.c.l.b16 %v76
    %v308 = vunpack.c.l.b16 %v77
    %v309 = vunpack.c.l.b16 %v78
    %v310 = vunpack.c.l.b16 %v79
    %v311 = vunpack.c.l.b16 %v80
    %v312 = vunpack.c.l.b16 %v81
    %v313 = vunpack.c.l.b16 %v82
    %v314 = vunpack.c.l.b16 %v83
    %v315 = vunpack.c.l.b16 %v84
    %v316 = vunpack.c.l.b16 %v85
    %v317 = vunpack.c.l.b16 %v86
    %v318 = vpack.c.b16 %v303, %v302
    %v319 = vpack.c.b16 %v305, %v304
    %v320 = vpack.c.b16 %v307, %v306
    %v321 = vpack.c.b16 %v309, %v308
    %v322 = vpack.c.b16 %v311, %v310
    %v323 = vpack.c.b16 %v313, %v312
    %v324 = vpack.c.b16 %v315, %v314
    %v325 = vpack.c.b16 %v317, %v316
    %334 = vmatpush.bf16.msra.mxu0 %v325
    %335 = vmatpush.bf16.msra.mxu0 %v324
    %336 = vmatpush.bf16.msra.mxu0 %v323
    %337 = vmatpush.bf16.msra.mxu0 %v322
    %338 = vmatpush.bf16.msra.mxu0 %v321
    %339 = vmatpush.bf16.msra.mxu0 %v320
    %340 = vmatpush.bf16.msra.mxu0 %v319
    %341 = vmatpush.bf16.msra.mxu0 %v318
    %342 = vmatmul.bf16.gmra.mxu0 0
    %v343 = vpop.f32.mrf.mxu0
    %v344 = vadd.f32 0.0, %v343
    %v345 = vpop.f32.mrf.mxu0
    %v346 = vadd.f32 0.0, %v345
    %347 = vdwg.mxu0
    %v348 = vadd.f32 %v284, %v344
    %v349 = vadd.f32 %v285, %v346
    %v350 = vtanh.pop %v348
    %v351 = vtanh.pop %v349
    %v352 = vpack.c.bf16 %v350, %v350
    %v353 = vpack.c.bf16 %v351, %v351
    %vm354 = vcmp.gt.s32.totalorder %v69, 0
    %vm355 = vcmp.gt.s32.totalorder %v70, 0
    %v356 = vsel %vm354, 1, 0
    %v357 = vsel %vm355, 1, 0
    %358 = vset.pattern.permute.xlu0 0
    %359 = vperm.xlu0 %358, %v356
    %v360 = vpop.permute.xlu0 %359
    %361 = vset.pattern.permute.xlu0 0
    %362 = vperm.xlu0 %361, %v357
    %v363 = vpop.permute.xlu0 %362
    %vm364 = vcmp.eq.s32.totalorder %v360, 1
    %vm365 = vcmp.eq.s32.totalorder %v363, 1
    %vm366 = vmpackc.low %vm364, %vm364
    %vm367 = vmpackc.low %vm365, %vm365
    %v368 = vsel %vm366, %v352, 0
    %v369 = vsel %vm367, %v353, 0
    %v370 = vld [vmem:[#allocation2 + $0x10] sm:$0xff]
    %v371 = vld [vmem:[#allocation2 + $0x18] sm:$0xff]
    %v374 = vunpack.c.l.b16 %v368
    %v375 = vunpack.c.l.b16 %v369
    %v376 = vpack.c.b16 %v375, %v374
    %378 = vmatpush.bf16.msra.mxu0 %v325
    %379 = vmatpush.bf16.msra.mxu0 %v324
    %380 = vmatpush.bf16.msra.mxu0 %v323
    %381 = vmatpush.bf16.msra.mxu0 %v322
    %382 = vmatpush.bf16.msra.mxu0 %v321
    %383 = vmatpush.bf16.msra.mxu0 %v320
    %384 = vmatpush.bf16.msra.mxu0 %v319
    %385 = vmatpush.bf16.msra.mxu0 %v318
    %386 = vmatmul.bf16.gmra.mxu0 %v376
    %v387 = vpop.f32.mrf.mxu0
    %v388 = vadd.f32 0.0, %v387
    %v389 = vpop.f32.mrf.mxu0
    %v390 = vadd.f32 0.0, %v389
    %391 = vdwg.mxu0
    %v392 = vadd.f32 %v370, %v388
    %v393 = vadd.f32 %v371, %v390
    %v394 = vtanh.pop %v392
    %v395 = vtanh.pop %v393
    %v396 = vpack.c.bf16 %v394, %v394
    %v397 = vpack.c.bf16 %v395, %v395
    %vm398 = vcmp.gt.s32.totalorder %v69, 1
    %vm399 = vcmp.gt.s32.totalorder %v70, 1
    %v400 = vsel %vm398, 1, 0
    %v401 = vsel %vm399, 1, 0
    %402 = vset.pattern.permute.xlu0 0
    %403 = vperm.xlu0 %402, %v400
    %v404 = vpop.permute.xlu0 %403
    %405 = vset.pattern.permute.xlu0 0
    %406 = vperm.xlu0 %405, %v401
    %v407 = vpop.permute.xlu0 %406
    %vm408 = vcmp.eq.s32.totalorder %v404, 1
    %vm409 = vcmp.eq.s32.totalorder %v407, 1
    %vm410 = vmpackc.low %vm408, %vm408
    %vm411 = vmpackc.low %vm409, %vm409
    %v412 = vsel %vm410, %v396, %v368
    %v413 = vsel %vm411, %v397, %v369
    %v414 = vld [vmem:[#allocation2 + $0x20] sm:$0xff]
    %v415 = vld [vmem:[#allocation2 + $0x28] sm:$0xff]
    %v418 = vunpack.c.l.b16 %v412
    %v419 = vunpack.c.l.b16 %v413
    %v420 = vpack.c.b16 %v419, %v418
    %422 = vmatpush.bf16.msra.mxu0 %v325
    %423 = vmatpush.bf16.msra.mxu0 %v324
    %424 = vmatpush.bf16.msra.mxu0 %v323
    %425 = vmatpush.bf16.msra.mxu0 %v322
    %426 = vmatpush.bf16.msra.mxu0 %v321
    %427 = vmatpush.bf16.msra.mxu0 %v320
    %428 = vmatpush.bf16.msra.mxu0 %v319
    %429 = vmatpush.bf16.msra.mxu0 %v318
    %430 = vmatmul.bf16.gmra.mxu0 %v420
    %v431 = vpop.f32.mrf.mxu0
    %v432 = vadd.f32 0.0, %v431
    %v433 = vpop.f32.mrf.mxu0
    %v434 = vadd.f32 0.0, %v433
    %435 = vdwg.mxu0
    %v436 = vadd.f32 %v414, %v432
    %v437 = vadd.f32 %v415, %v434
    %v438 = vtanh.pop %v436
    %v439 = vtanh.pop %v437
    %v440 = vpack.c.bf16 %v438, %v438
    %v441 = vpack.c.bf16 %v439, %v439
    %vm442 = vcmp.gt.s32.totalorder %v69, 2
    %vm443 = vcmp.gt.s32.totalorder %v70, 2
    %v444 = vsel %vm442, 1, 0
    %v445 = vsel %vm443, 1, 0
    %446 = vset.pattern.permute.xlu0 0
    %447 = vperm.xlu0 %446, %v444
    %v448 = vpop.permute.xlu0 %447
    %449 = vset.pattern.permute.xlu0 0
    %450 = vperm.xlu0 %449, %v445
    %v451 = vpop.permute.xlu0 %450
    %vm452 = vcmp.eq.s32.totalorder %v448, 1
    %vm453 = vcmp.eq.s32.totalorder %v451, 1
    %vm454 = vmpackc.low %vm452, %vm452
    %vm455 = vmpackc.low %vm453, %vm453
    %v456 = vsel %vm454, %v440, %v412
    %v457 = vsel %vm455, %v441, %v413
    %v458 = vld [vmem:[#allocation2 + $0x30] sm:$0xff]
    %v459 = vld [vmem:[#allocation2 + $0x38] sm:$0xff]
    %v462 = vunpack.c.l.b16 %v456
    %v463 = vunpack.c.l.b16 %v457
    %v464 = vpack.c.b16 %v463, %v462
    %466 = vmatpush.bf16.msra.mxu0 %v325
    %467 = vmatpush.bf16.msra.mxu0 %v324
    %468 = vmatpush.bf16.msra.mxu0 %v323
    %469 = vmatpush.bf16.msra.mxu0 %v322
    %470 = vmatpush.bf16.msra.mxu0 %v321
    %471 = vmatpush.bf16.msra.mxu0 %v320
    %472 = vmatpush.bf16.msra.mxu0 %v319
    %473 = vmatpush.bf16.msra.mxu0 %v318
    %474 = vmatmul.bf16.gmra.mxu0 %v464
    %v475 = vpop.f32.mrf.mxu0
    %v476 = vadd.f32 0.0, %v475
    %v477 = vpop.f32.mrf.mxu0
    %v478 = vadd.f32 0.0, %v477
    %479 = vdwg.mxu0
    %v480 = vadd.f32 %v458, %v476
    %v481 = vadd.f32 %v459, %v478
    %v482 = vtanh.pop %v480
    %v483 = vtanh.pop %v481
    %v484 = vpack.c.bf16 %v482, %v482
    %v485 = vpack.c.bf16 %v483, %v483
    %vm486 = vcmp.gt.s32.totalorder %v69, 3
    %vm487 = vcmp.gt.s32.totalorder %v70, 3
    %v488 = vsel %vm486, 1, 0
    %v489 = vsel %vm487, 1, 0
    %490 = vset.pattern.permute.xlu0 0
    %491 = vperm.xlu0 %490, %v488
    %v492 = vpop.permute.xlu0 %491
    %493 = vset.pattern.permute.xlu0 0
    %494 = vperm.xlu0 %493, %v489
    %v495 = vpop.permute.xlu0 %494
    %vm496 = vcmp.eq.s32.totalorder %v492, 1
    %vm497 = vcmp.eq.s32.totalorder %v495, 1
    %vm498 = vmpackc.low %vm496, %vm496
    %vm499 = vmpackc.low %vm497, %vm497
    %v500 = vsel %vm498, %v484, %v456
    %v501 = vsel %vm499, %v485, %v457
    %v502 = vld [vmem:[#allocation2 + $0x40] sm:$0xff]
    %v503 = vld [vmem:[#allocation2 + $0x48] sm:$0xff]
    %v506 = vunpack.c.l.b16 %v500
    %v507 = vunpack.c.l.b16 %v501
    %v508 = vpack.c.b16 %v507, %v506
    %510 = vmatpush.bf16.msra.mxu0 %v325
    %511 = vmatpush.bf16.msra.mxu0 %v324
    %512 = vmatpush.bf16.msra.mxu0 %v323
    %513 = vmatpush.bf16.msra.mxu0 %v322
    %514 = vmatpush.bf16.msra.mxu0 %v321
    %515 = vmatpush.bf16.msra.mxu0 %v320
    %516 = vmatpush.bf16.msra.mxu0 %v319
    %517 = vmatpush.bf16.msra.mxu0 %v318
    %518 = vmatmul.bf16.gmra.mxu0 %v508
    %v519 = vpop.f32.mrf.mxu0
    %v520 = vadd.f32 0.0, %v519
    %v521 = vpop.f32.mrf.mxu0
    %v522 = vadd.f32 0.0, %v521
    %523 = vdwg.mxu0
    %v524 = vadd.f32 %v502, %v520
    %v525 = vadd.f32 %v503, %v522
    %v526 = vtanh.pop %v524
    %v527 = vtanh.pop %v525
    %v528 = vpack.c.bf16 %v526, %v526
    %v529 = vpack.c.bf16 %v527, %v527
    %vm530 = vcmp.gt.s32.totalorder %v69, 4
    %vm531 = vcmp.gt.s32.totalorder %v70, 4
    %v532 = vsel %vm530, 1, 0
    %v533 = vsel %vm531, 1, 0
    %534 = vset.pattern.permute.xlu0 0
    %535 = vperm.xlu0 %534, %v532
    %v536 = vpop.permute.xlu0 %535
    %537 = vset.pattern.permute.xlu0 0
    %538 = vperm.xlu0 %537, %v533
    %v539 = vpop.permute.xlu0 %538
    %vm540 = vcmp.eq.s32.totalorder %v536, 1
    %vm541 = vcmp.eq.s32.totalorder %v539, 1
    %vm542 = vmpackc.low %vm540, %vm540
    %vm543 = vmpackc.low %vm541, %vm541
    %v544 = vsel %vm542, %v528, %v500
    %v545 = vsel %vm543, %v529, %v501
    %v546 = vld [vmem:[#allocation2 + $0x50] sm:$0xff]
    %v547 = vld [vmem:[#allocation2 + $0x58] sm:$0xff]
    %v550 = vunpack.c.l.b16 %v544
    %v551 = vunpack.c.l.b16 %v545
    %v552 = vpack.c.b16 %v551, %v550
    %554 = vmatpush.bf16.msra.mxu0 %v325
    %555 = vmatpush.bf16.msra.mxu0 %v324
    %556 = vmatpush.bf16.msra.mxu0 %v323
    %557 = vmatpush.bf16.msra.mxu0 %v322
    %558 = vmatpush.bf16.msra.mxu0 %v321
    %559 = vmatpush.bf16.msra.mxu0 %v320
    %560 = vmatpush.bf16.msra.mxu0 %v319
    %561 = vmatpush.bf16.msra.mxu0 %v318
    %562 = vmatmul.bf16.gmra.mxu0 %v552
    %v563 = vpop.f32.mrf.mxu0
    %v564 = vadd.f32 0.0, %v563
    %v565 = vpop.f32.mrf.mxu0
    %v566 = vadd.f32 0.0, %v565
    %567 = vdwg.mxu0
    %v568 = vadd.f32 %v546, %v564
    %v569 = vadd.f32 %v547, %v566
    %v570 = vtanh.pop %v568
    %v571 = vtanh.pop %v569
    %v572 = vpack.c.bf16 %v570, %v570
    %v573 = vpack.c.bf16 %v571, %v571
    %vm574 = vcmp.gt.s32.totalorder %v69, 5
    %vm575 = vcmp.gt.s32.totalorder %v70, 5
    %v576 = vsel %vm574, 1, 0
    %v577 = vsel %vm575, 1, 0
    %578 = vset.pattern.permute.xlu0 0
    %579 = vperm.xlu0 %578, %v576
    %v580 = vpop.permute.xlu0 %579
    %581 = vset.pattern.permute.xlu0 0
    %582 = vperm.xlu0 %581, %v577
    %v583 = vpop.permute.xlu0 %582
    %vm584 = vcmp.eq.s32.totalorder %v580, 1
    %vm585 = vcmp.eq.s32.totalorder %v583, 1
    %vm586 = vmpackc.low %vm584, %vm584
    %vm587 = vmpackc.low %vm585, %vm585
    %v588 = vsel %vm586, %v572, %v544
    %v589 = vsel %vm587, %v573, %v545
    %v590 = vld [vmem:[#allocation2 + $0x60] sm:$0xff]
    %v591 = vld [vmem:[#allocation2 + $0x68] sm:$0xff]
    %v594 = vunpack.c.l.b16 %v588
    %v595 = vunpack.c.l.b16 %v589
    %v596 = vpack.c.b16 %v595, %v594
    %598 = vmatpush.bf16.msra.mxu0 %v325
    %599 = vmatpush.bf16.msra.mxu0 %v324
    %600 = vmatpush.bf16.msra.mxu0 %v323
    %601 = vmatpush.bf16.msra.mxu0 %v322
    %602 = vmatpush.bf16.msra.mxu0 %v321
    %603 = vmatpush.bf16.msra.mxu0 %v320
    %604 = vmatpush.bf16.msra.mxu0 %v319
    %605 = vmatpush.bf16.msra.mxu0 %v318
    %606 = vmatmul.bf16.gmra.mxu0 %v596
    %v607 = vpop.f32.mrf.mxu0
    %v608 = vadd.f32 0.0, %v607
    %v609 = vpop.f32.mrf.mxu0
    %v610 = vadd.f32 0.0, %v609
    %611 = vdwg.mxu0
    %v612 = vadd.f32 %v590, %v608
    %v613 = vadd.f32 %v591, %v610
    %v614 = vtanh.pop %v612
    %v615 = vtanh.pop %v613
    %v616 = vpack.c.bf16 %v614, %v614
    %v617 = vpack.c.bf16 %v615, %v615
    %vm618 = vcmp.gt.s32.totalorder %v69, 6
    %vm619 = vcmp.gt.s32.totalorder %v70, 6
    %v620 = vsel %vm618, 1, 0
    %v621 = vsel %vm619, 1, 0
    %622 = vset.pattern.permute.xlu0 0
    %623 = vperm.xlu0 %622, %v620
    %v624 = vpop.permute.xlu0 %623
    %625 = vset.pattern.permute.xlu0 0
    %626 = vperm.xlu0 %625, %v621
    %v627 = vpop.permute.xlu0 %626
    %vm628 = vcmp.eq.s32.totalorder %v624, 1
    %vm629 = vcmp.eq.s32.totalorder %v627, 1
    %vm630 = vmpackc.low %vm628, %vm628
    %vm631 = vmpackc.low %vm629, %vm629
    %v632 = vsel %vm630, %v616, %v588
    %v633 = vsel %vm631, %v617, %v589
    %v634 = vld [vmem:[#allocation2 + $0x70] sm:$0xff]
    %v635 = vld [vmem:[#allocation2 + $0x78] sm:$0xff]
    %v638 = vunpack.c.l.b16 %v632
    %v639 = vunpack.c.l.b16 %v633
    %v640 = vpack.c.b16 %v639, %v638
    %642 = vmatpush.bf16.msra.mxu0 %v325
    %643 = vmatpush.bf16.msra.mxu0 %v324
    %644 = vmatpush.bf16.msra.mxu0 %v323
    %645 = vmatpush.bf16.msra.mxu0 %v322
    %646 = vmatpush.bf16.msra.mxu0 %v321
    %647 = vmatpush.bf16.msra.mxu0 %v320
    %648 = vmatpush.bf16.msra.mxu0 %v319
    %649 = vmatpush.bf16.msra.mxu0 %v318
    %650 = vmatmul.bf16.gmra.mxu0 %v640
    %v651 = vpop.f32.mrf.mxu0
    %v652 = vadd.f32 0.0, %v651
    %v653 = vpop.f32.mrf.mxu0
    %v654 = vadd.f32 0.0, %v653
    %655 = vdwg.mxu0
    %v656 = vadd.f32 %v634, %v652
    %v657 = vadd.f32 %v635, %v654
    %v658 = vtanh.pop %v656
    %v659 = vtanh.pop %v657
    %v660 = vpack.c.bf16 %v658, %v658
    %v661 = vpack.c.bf16 %v659, %v659
    %vm662 = vcmp.gt.s32.totalorder %v69, 7
    %vm663 = vcmp.gt.s32.totalorder %v70, 7
    %v664 = vsel %vm662, 1, 0
    %v665 = vsel %vm663, 1, 0
    %666 = vset.pattern.permute.xlu0 0
    %667 = vperm.xlu0 %666, %v664
    %v668 = vpop.permute.xlu0 %667
    %669 = vset.pattern.permute.xlu0 0
    %670 = vperm.xlu0 %669, %v665
    %v671 = vpop.permute.xlu0 %670
    %vm672 = vcmp.eq.s32.totalorder %v668, 1
    %vm673 = vcmp.eq.s32.totalorder %v671, 1
    %vm674 = vmpackc.low %vm672, %vm672
    %vm675 = vmpackc.low %vm673, %vm673
    %v676 = vsel %vm674, %v660, %v632
    %v677 = vsel %vm675, %v661, %v633
    %v678 = vunpack.c.l.bf16 %v676
    %v679 = vunpack.c.l.bf16 %v677
    %680 = vst [vmem:[#allocation9] sm:$0xff] %v678
    %681 = vst [vmem:[#allocation9 + $0x8] sm:$0xff] %v679
    // Predicated region
    $region34: #{tpu_custom_call.1} parent=1 // pred_check
      _
    $region35: #{tpu_custom_call.1} parent=1 // pred_check_branch
      %683 = sbr.rel (0) target = $region37
    $region36: #{tpu_custom_call.1} parent=1 // pred_region
      %685 = vsyncadd [#allocation5], 0
      %s686 = sshll.u32 [#allocation9], 4
      %s687 = int_to_ptr.vmem [resolvable:$true] %s686
      %s688 = sshll.u32 %s5, 4
      %s689 = int_to_ptr.hbm [resolvable:$true] %s688
      %694 = dma.vmem_to_hbm [thread:$0]  %s687, 256, %s689, [#allocation5], 128, 128, 8
    $region37: #{tpu_custom_call.1} parent=1 // pred_fallthru
      _
    // Predicated region
    $region38: #{tpu_custom_call.1} parent=1 // pred_check
      _
    $region39: #{tpu_custom_call.1} parent=1 // pred_check_branch
      %696 = sbr.rel (0) target = $region41
    $region40: #{tpu_custom_call.1} parent=1 // pred_region
      %698 = dma.done [#allocation5], 256
    $region41: #{tpu_custom_call.1} parent=1 // pred_fallthru
      _
    %699 = vsyncpa [#allocation4], 1
    %700 = vsyncpa [#allocation7], 1
    %701 = vsyncpa [#allocation5], 1

</llo_original>
